<compile_context>
chip_gen: v6e
topology: v6e:2x2x1
jax: 0.10.0
libtpu: 0.0.40
codegen_flags: <defaults>
</compile_context>

<pallas_src>
import jax
import jax.numpy as jnp
from jax.experimental import pallas as pl
from jax.experimental.pallas import tpu as pltpu


def conv3d_relu6_kernel(t_ref, w_ref, b_ref, o_ref):
    # t_ref: (n_taps, Cout*P)  VMEM  -- tap t duplicated across channel halves
    # w_ref: (n_taps, Cout*P)  VMEM  -- row t = [w[0,t]]*P ++ [w[1,t]]*P
    # b_ref: (1,      Cout*P)  VMEM  -- [b[0]]*P ++ [b[1]]*P
    # o_ref: (1,      Cout*P)  VMEM  -- single unmasked lane-dense store
    prod = t_ref[...] * w_ref[...]                       # one (8,128) VPU mul
    acc = jnp.sum(prod, axis=0, keepdims=True)           # sublane reduce (XLU)
    o_ref[...] = jnp.clip(acc + b_ref[...], 0.0, 6.0).astype(o_ref.dtype)


def module_test_forward(x, w, b):
    """x: (N, Cin, D, H, W) NCDHW; w: (Cout, Cin, KD, KH, KW); b: (Cout,)."""
    N, Cin, D, H, W = x.shape
    Cout, _, KD, KH, KW = w.shape
    Do, Ho, Wo = D - KD + 1, H - KH + 1, W - KW + 1
    P = Do * Ho * Wo                      # 64
    n_taps = Cin * KD * KH * KW           # 8
    assert N == 1, "kernel written for the module's N=1 input"
    # TODO(synk): for N>1, batch the im2col taps and add a leading 'parallel'
    # grid axis so v7x's second TensorCore is used.

    # ---- wrapper-side layout plumbing (im2col), fused cheaply by XLA ----
    x3 = x[0]                                            # (Cin, D, H, W)
    taps = []
    for ic in range(Cin):                 # tap order matches OIDHW flattening
        for kd in range(KD):
            for kh in range(KH):
                for kw in range(KW):
                    taps.append(x3[ic, kd:kd + Do, kh:kh + Ho, kw:kw + Wo]
                                .reshape(P))
    taps = jnp.stack(taps, axis=0)                       # (n_taps, P)
    taps2 = jnp.tile(taps, (1, Cout))                    # (n_taps, Cout*P)

    wflat = w.reshape(Cout, n_taps)                      # (Cout, n_taps)
    # weight plane: row t = [w[0,t]]*P ++ [w[1,t]]*P ...
    wplane = jnp.repeat(wflat.T[:, :, None], P, axis=-1).reshape(n_taps,
                                                                 Cout * P)
    bplane = jnp.repeat(b, P).reshape(1, Cout * P)       # (1, Cout*P)

    n_bytes = 4 * (taps2.size + wplane.size + bplane.size + Cout * P)
    flat = pl.pallas_call(
        conv3d_relu6_kernel,
        out_shape=jax.ShapeDtypeStruct((1, Cout * P), jnp.float32),
        in_specs=[
            pl.BlockSpec(memory_space=pltpu.VMEM),   # taps  (8,128) dense tile
            pl.BlockSpec(memory_space=pltpu.VMEM),   # weight plane (8,128)
            pl.BlockSpec(memory_space=pltpu.VMEM),   # bias plane (1,128)
        ],
        out_specs=pl.BlockSpec(memory_space=pltpu.VMEM),
        cost_estimate=pl.CostEstimate(
            flops=2 * Cout * n_taps * P,             # ~2 KFLOPs
            transcendentals=0,
            bytes_accessed=n_bytes),
    )(taps2, wplane, bplane)

    # Layout plumbing back to NCDHW.
    return flat.reshape(N, Cout, Do, Ho, Wo)


def reference_forward(x, w, b):
    out = jax.lax.conv_general_dilated(
        x, w, window_strides=(1, 1, 1), padding="VALID",
        dimension_numbers=("NCDHW", "OIDHW", "NCDHW"))
    out = out + b.reshape(1, -1, 1, 1, 1)
    return jnp.clip(out, 0.0, 6.0)


if __name__ == "__main__":
    key = jax.random.PRNGKey(0)
    kx, kw, kb = jax.random.split(key, 3)

    # Shapes implied by the module: x = (1, 1, 5, 5, 5), Conv3d(1->2, k=2)
    x = jax.random.normal(kx, (1, 1, 5, 5, 5), dtype=jnp.float32)

    Cout, Cin, K = 2, 1, 2
    fan_in = Cin * K * K * K
    bound = 1.0 / (fan_in ** 0.5)  # PyTorch default conv init range
    w = jax.random.uniform(kw, (Cout, Cin, K, K, K), jnp.float32, -bound, bound)
    b = jax.random.uniform(kb, (Cout,), jnp.float32, -bound, bound)

    out = module_test_forward(x, w, b)
    out = jax.block_until_ready(out)

    ref = reference_forward(x, w, b)
    assert out.shape == (1, 2, 4, 4, 4), out.shape
    assert jnp.allclose(out, ref, atol=1e-5, rtol=1e-5)

    print("KERNEL_OK")
</pallas_src>

<mosaic_0001>
module attributes {stable_mosaic.version = 11 : i64} {
  func.func @conv3d_relu6_kernel(%arg0: memref<8x128xf32, #tpu.memory_space<vmem>>, %arg1: memref<8x128xf32, #tpu.memory_space<vmem>>, %arg2: memref<1x128xf32, #tpu.memory_space<vmem>>, %arg3: memref<1x128xf32, #tpu.memory_space<vmem>>) attributes {dimension_semantics = [], scalar_prefetch = 0 : i64, scratch_operands = 0 : i64, tpu.core_type = #tpu.core_type<tc>} {
    %c0 = arith.constant 0 : index
    %c0_0 = arith.constant 0 : index
    %0 = vector.load %arg0[%c0, %c0_0] : memref<8x128xf32, #tpu.memory_space<vmem>>, vector<8x128xf32>
    %c0_1 = arith.constant 0 : index
    %c0_2 = arith.constant 0 : index
    %1 = vector.load %arg1[%c0_1, %c0_2] : memref<8x128xf32, #tpu.memory_space<vmem>>, vector<8x128xf32>
    %2 = arith.mulf %0, %1 : vector<8x128xf32>
    %cst = arith.constant dense<0.000000e+00> : vector<128xf32>
    %3 = vector.multi_reduction <add>, %2, %cst [0] : vector<8x128xf32> to vector<128xf32>
    %4 = vector.shape_cast %3 : vector<128xf32> to vector<1x128xf32>
    %c0_3 = arith.constant 0 : index
    %c0_4 = arith.constant 0 : index
    %5 = vector.load %arg2[%c0_3, %c0_4] : memref<1x128xf32, #tpu.memory_space<vmem>>, vector<1x128xf32>
    %6 = arith.addf %4, %5 : vector<1x128xf32>
    %cst_5 = arith.constant 0.000000e+00 : f32
    %cst_6 = arith.constant 6.000000e+00 : f32
    %7 = vector.broadcast %cst_5 : f32 to vector<1x128xf32>
    %8 = arith.maximumf %7, %6 : vector<1x128xf32>
    %9 = vector.broadcast %cst_6 : f32 to vector<1x128xf32>
    %10 = arith.minimumf %9, %8 : vector<1x128xf32>
    %c0_7 = arith.constant 0 : index
    %c0_8 = arith.constant 0 : index
    %11 = vector.load %arg3[%c0_7, %c0_8] : memref<1x128xf32, #tpu.memory_space<vmem>>, vector<1x128xf32>
    tpu.vector_store %arg3[%c0_7, %c0_8], %10 {strides = array<i32>} : memref<1x128xf32, #tpu.memory_space<vmem>>, vector<1x128xf32>,
    return
  }
}

</mosaic_0001>

<llo_original>
// kernel: tpu_custom_call.1
$region0: #{tpu_custom_call.1}
  #allocation0 [shape = 'u32[]', space=smem, size = 0x4, offset = 0x4, fixed_abs, tag = 'smem constant byte address 0x4 - core index']
  #allocation1 [shape = 'u32[144,128]{1,0:T(1,128)}', space=vmem, size = 0x12000, scoped, tag = 'internal scratch']
  %s0 = inlined_call_operand.hbm [shape: f32[8,128], index: 0, kind: input, shape index: {}]
  %s1 = inlined_call_operand.hbm [shape: f32[8,128], index: 1, kind: input, shape index: {}]
  %s2 = inlined_call_operand.vmem [shape: f32[1,128], index: 2, kind: input, shape index: {}]
  %s3 = inlined_call_operand.hbm [shape: f32[1,128], index: 3, kind: output, shape index: {}]
  %s4 = sld [smem:[#allocation0]]
  $region30: #{tpu_custom_call.1} parent=0
    _
  %s6 = ssub.s32 1, %s4
  %s7 = scalar_select 0, %s6, %s4
  $region1: #{tpu_custom_call.1} parent=0
    #allocation2 [shape = 'u8[4096]{0}', space=vmem, size = 0x1000, scoped, tag = 'input window, operand 0, single buffered']
    #allocation3 [shape = 's32[1]{0}', space=sflag, size = 0x4, scoped, tag = 'scoped memory for tpu_custom_call.1']
    #allocation4 [shape = 's32[1]{0}', space=sflag, size = 0x4, scoped, tag = 'scoped memory for tpu_custom_call.1']
    #allocation5 [shape = 'u8[4096]{0}', space=vmem, size = 0x1000, scoped, tag = 'input window, operand 1, single buffered']
    #allocation6 [shape = 's32[1]{0}', space=sflag, size = 0x4, scoped, tag = 'scoped memory for tpu_custom_call.1']
    #allocation7 [shape = 'u8[512]{0}', space=vmem, size = 0x400, scoped, tag = 'output window, operand 0, single buffered']
    %8 = vsyncpa [#allocation3], 0
    %9 = vsyncpa [#allocation6], 0
    %10 = vsyncpa [#allocation4], 0
    // Predicated region
    $region2: #{tpu_custom_call.1} parent=1 // pred_check
      _
    $region3: #{tpu_custom_call.1} parent=1 // pred_check_branch
      %12 = sbr.rel (0) target = $region5
    $region4: #{tpu_custom_call.1} parent=1 // pred_region
      %s14 = ssub.s32 128, 128
      %15 = vsyncadd [#allocation3], %s14
      %s17 = sshll.u32 [#allocation2], 4
      %s18 = int_to_ptr.vmem [resolvable:$true] %s17
      %20 = dma.hbm_to_vmem [thread:$0]  %s0, 128, %s18, [#allocation3]
    $region5: #{tpu_custom_call.1} parent=1 // pred_fallthru
      _
    // Predicated region
    $region6: #{tpu_custom_call.1} parent=1 // pred_check
      _
    $region7: #{tpu_custom_call.1} parent=1 // pred_check_branch
      %22 = sbr.rel (0) target = $region9
    $region8: #{tpu_custom_call.1} parent=1 // pred_region
      %s24 = ssub.s32 128, 128
      %25 = vsyncadd [#allocation6], %s24
      %s27 = sshll.u32 [#allocation5], 4
      %s28 = int_to_ptr.vmem [resolvable:$true] %s27
      %30 = dma.hbm_to_vmem [thread:$0]  %s1, 128, %s28, [#allocation6]
    $region9: #{tpu_custom_call.1} parent=1 // pred_fallthru
      _
    // Predicated region
    $region10: #{tpu_custom_call.1} parent=1 // pred_check
      _
    $region11: #{tpu_custom_call.1} parent=1 // pred_check_branch
      %32 = sbr.rel (0) target = $region13
    $region12: #{tpu_custom_call.1} parent=1 // pred_region
      _
    $region13: #{tpu_custom_call.1} parent=1 // pred_fallthru
      _
    // Predicated region
    $region14: #{tpu_custom_call.1} parent=1 // pred_check
      _
    $region15: #{tpu_custom_call.1} parent=1 // pred_check_branch
      %34 = sbr.rel (0) target = $region17
    $region16: #{tpu_custom_call.1} parent=1 // pred_region
      %35 = dma.done [#allocation3], 128
    $region17: #{tpu_custom_call.1} parent=1 // pred_fallthru
      _
    // Predicated region
    $region18: #{tpu_custom_call.1} parent=1 // pred_check
      _
    $region19: #{tpu_custom_call.1} parent=1 // pred_check_branch
      %37 = sbr.rel (0) target = $region21
    $region20: #{tpu_custom_call.1} parent=1 // pred_region
      %38 = dma.done [#allocation6], 128
    $region21: #{tpu_custom_call.1} parent=1 // pred_fallthru
      _
    %v39 = vld [vmem:[#allocation2] sm:$0xff]
    %v40 = vld [vmem:[#allocation5] sm:$0xff]
    %v41 = vmul.f32 %v39, %v40
    %v42 = vrot.slane %v41, 4
    %v43 = vadd.f32 %v41, %v42
    %v44 = vrot.slane %v43, 2
    %v45 = vadd.f32 %v43, %v44
    %v46 = vrot.slane %v45, 1
    %v47 = vadd.f32 %v45, %v46
    %v48 = vld [vmem:[%s2] sm:$0x1]
    %v49 = vadd.f32 %v47, %v48
    %v50 = vmax.f32 %v49, 0.0
    %v51 = vmin.f32 %v50, 6.0
    %52 = vst [vmem:[#allocation7] sm:$0x1] %v51
    // Predicated region
    $region22: #{tpu_custom_call.1} parent=1 // pred_check
      _
    $region23: #{tpu_custom_call.1} parent=1 // pred_check_branch
      %54 = sbr.rel (0) target = $region25
    $region24: #{tpu_custom_call.1} parent=1 // pred_region
      %s56 = ssub.s32 16, 16
      %57 = vsyncadd [#allocation4], %s56
      %s59 = sshll.u32 [#allocation7], 4
      %s60 = int_to_ptr.vmem [resolvable:$true] %s59
      %62 = dma.vmem_to_hbm [thread:$0]  %s60, 16, %s3, [#allocation4]
    $region25: #{tpu_custom_call.1} parent=1 // pred_fallthru
      _
    // Predicated region
    $region26: #{tpu_custom_call.1} parent=1 // pred_check
      _
    $region27: #{tpu_custom_call.1} parent=1 // pred_check_branch
      %64 = sbr.rel (0) target = $region29
    $region28: #{tpu_custom_call.1} parent=1 // pred_region
      %65 = dma.done [#allocation4], 16
    $region29: #{tpu_custom_call.1} parent=1 // pred_fallthru
      _
    %66 = vsyncpa [#allocation3], 1
    %67 = vsyncpa [#allocation6], 1
    %68 = vsyncpa [#allocation4], 1

</llo_original>
